<compile_context>
chip_gen: v7x
topology: tpu7x:2x2x1
jax: 0.10.0
libtpu: 0.0.40
codegen_flags: <defaults>
</compile_context>

<pallas_src>
import jax
import jax.numpy as jnp
from jax.experimental import pallas as pl
from jax.experimental.pallas import tpu as pltpu


def self_attention_kernel(x_ref, w_ref, b_ref, lens_ref, o_ref):
    # x_ref:    (TB, S, Dp)  activations (input dtype; math done in f32)
    # w_ref:    (1, 1, Dp)   scorer weight, lane-dense, f32
    # b_ref:    (1, 1, 1)    scorer bias, f32
    # lens_ref: (TB, 1, 1)   valid lengths (int32)
    # o_ref:    (TB, Dp)     context output (input dtype)
    xf = x_ref[...].astype(jnp.float32)
    w = w_ref[...]
    b = b_ref[...]
    lens = lens_ref[...]                                       # (TB, 1, 1) int32

    tb, s, _ = xf.shape

    # Scorer: VPU multiply + lane (last-dim) reduce over D.  keepdims keeps a
    # single 3-D layout for the whole kernel (no relayout copies).
    scores = jnp.sum(xf * w, axis=-1, keepdims=True) + b       # (TB, S, 1)

    # Mask positions >= lens[b].  Large-negative fill (not -inf) so fully
    # masked / block-padding rows never hit inf - inf = NaN.
    ids = jax.lax.broadcasted_iota(jnp.int32, (tb, s, 1), 1)   # (TB, S, 1)
    mask = ids < lens                                          # (TB, S, 1)
    neg = jnp.float32(-3.0e38)
    scores = jnp.where(mask, scores, neg)

    # Numerically stable softmax over S (sublane reduces on the XLU,
    # exp on the EUP).
    m = jnp.max(scores, axis=1, keepdims=True)                 # (TB, 1, 1)
    p = jnp.where(mask, jnp.exp(scores - m), 0.0)              # (TB, S, 1)
    denom = jnp.sum(p, axis=1, keepdims=True)                  # (TB, 1, 1)
    # denom >= 1 whenever a row has any valid position; the clamp only guards
    # lens == 0 rows (context becomes 0 instead of NaN).  Exact reciprocal is
    # kept so the 1e-5 tolerance is safe.
    inv = pl.reciprocal(jnp.maximum(denom, jnp.float32(1e-30)), approx=False)
    attn = p * inv                                             # (TB, S, 1)

    # Context: broadcast-multiply (VPU) + sublane reduce over S (XLU).
    ctx = jnp.sum(attn * xf, axis=1)                           # (TB, Dp)
    o_ref[...] = ctx.astype(o_ref.dtype)


def self_attention(input_seq, lens, weight, bias,
                   *, vmem_budget_bytes=8 * 1024 * 1024):
    """input_seq: (B, S, D) float; lens: (B,) int; weight: (1, D); bias: (1,)."""
    B, S, D = input_seq.shape
    in_dtype = input_seq.dtype

    # Lane-align the feature dim so the output store is unmasked / lane-dense.
    # Zero padding is exact: padded weight columns are zero (scores unchanged)
    # and padded context columns are zero and sliced off below.
    Dp = max(128, ((D + 127) // 128) * 128)
    if Dp != D:
        x = jnp.pad(input_seq, ((0, 0), (0, 0), (0, Dp - D)))
        w2 = jnp.pad(weight.reshape(1, D), ((0, 0), (0, Dp - D)))
    else:
        x = input_seq
        w2 = weight.reshape(1, D)
    w3 = w2.reshape(1, 1, Dp).astype(jnp.float32)
    b3 = bias.reshape(1, 1, 1).astype(jnp.float32)
    lens3 = lens.reshape(B, 1, 1).astype(jnp.int32)

    # Batch tile: largest tile whose per-buffer activation block stays under
    # the budget (Pallas double-buffers it).  The batch dim is the leading
    # (non-tiled-layout) axis, so TB has no (8,128) constraint, but we keep it
    # a multiple of 8 for clean sublane packing of the (TB, Dp) output tile.
    row_bytes = S * Dp * jnp.dtype(in_dtype).itemsize
    rows_fit = max(1, vmem_budget_bytes // max(row_bytes, 1))
    if rows_fit >= B:
        tb = B
    else:
        tb = max(8, (rows_fit // 8) * 8)
        # TODO(synk): for very long S*Dp (tile over budget even at TB=8), add
        # a second "arbitrary" grid axis over S with an online-softmax
        # accumulator instead of growing the block.
    grid = (pl.cdiv(B, tb),)

    out = pl.pallas_call(
        self_attention_kernel,
        out_shape=jax.ShapeDtypeStruct((B, Dp), in_dtype),
        grid=grid,
        in_specs=[
            pl.BlockSpec((tb, S, Dp), lambda i: (i, 0, 0)),    # activations
            pl.BlockSpec((1, 1, Dp), lambda i: (0, 0, 0)),     # scorer weight
            pl.BlockSpec((1, 1, 1), lambda i: (0, 0, 0)),      # scorer bias
            pl.BlockSpec((tb, 1, 1), lambda i: (i, 0, 0)),     # lens
        ],
        out_specs=pl.BlockSpec((tb, Dp), lambda i: (i, 0)),
        compiler_params=pltpu.CompilerParams(
            dimension_semantics=("parallel",),
            vmem_limit_bytes=48 * 1024 * 1024,   # headroom on v7x's 64 MiB
        ),
    )(x, w3, b3, lens3)
    return out[:, :D]


def self_attention_ref(input_seq, lens, weight, bias):
    """Plain-JAX reference mirroring the PyTorch forward."""
    B, S, D = input_seq.shape
    scores = input_seq.reshape(-1, D) @ weight.reshape(1, D).T + bias  # (B*S, 1)
    scores = scores.reshape(B, S)
    ids = jnp.arange(S)[None, :]
    scores = jnp.where(ids < lens[:, None], scores, -jnp.inf)
    attn = jax.nn.softmax(scores, axis=1)
    return jnp.sum(attn[:, :, None] * input_seq, axis=1)


if __name__ == "__main__":
    B, S, D = 2, 8, 32  # batch, seq_len, d_hid

    key = jax.random.PRNGKey(0)
    k_x, k_w, k_b = jax.random.split(key, 3)

    input_seq = jax.random.normal(k_x, (B, S, D), dtype=jnp.float32)
    lens = jnp.array([S, 5], dtype=jnp.int32)

    # nn.Linear(d_hid, 1): weight (1, d_hid), bias (1,) — deterministic init.
    weight = jax.random.normal(k_w, (1, D), dtype=jnp.float32) * (1.0 / jnp.sqrt(D))
    bias = jax.random.normal(k_b, (1,), dtype=jnp.float32) * 0.01

    out = jax.block_until_ready(self_attention(input_seq, lens, weight, bias))
    ref = self_attention_ref(input_seq, lens, weight, bias)

    assert out.shape == (B, D)
    assert jnp.allclose(out, ref, atol=1e-5, rtol=1e-5), "mismatch vs reference"

    print("KERNEL_OK")
</pallas_src>

<mosaic_0001>
module attributes {stable_mosaic.version = 11 : i64} {
  func.func @self_attention_kernel(%arg0: i32, %arg1: memref<2x8x128xf32, #tpu.memory_space<vmem>>, %arg2: memref<1x1x128xf32, #tpu.memory_space<vmem>>, %arg3: memref<1x1x1xf32, #tpu.memory_space<vmem>>, %arg4: memref<2x1x1xi32, #tpu.memory_space<vmem>>, %arg5: memref<2x128xf32, #tpu.memory_space<vmem>>) attributes {dimension_semantics = [#tpu.dimension_semantics<parallel>], iteration_bounds = array<i64: 1>, scalar_prefetch = 0 : i64, scratch_operands = 0 : i64, tpu.core_type = #tpu.core_type<tc>, window_params = [{transform_indices = @transform_0, window_bounds = array<i64: 2, 8, 128>}, {pipeline_mode = #tpu.pipeline_mode<synchronous>, transform_indices = @transform_1, window_bounds = array<i64: 1, 1, 128>}, {pipeline_mode = #tpu.pipeline_mode<synchronous>, transform_indices = @transform_2, window_bounds = array<i64: 1, 1, 1>}, {transform_indices = @transform_3, window_bounds = array<i64: 2, 1, 1>}, {transform_indices = @transform_4, window_bounds = array<i64: 2, 128>}]} {
    %c0 = arith.constant 0 : index
    %c0_0 = arith.constant 0 : index
    %c0_1 = arith.constant 0 : index
    %0 = vector.load %arg1[%c0, %c0_0, %c0_1] : memref<2x8x128xf32, #tpu.memory_space<vmem>>, vector<2x8x128xf32>
    %c0_2 = arith.constant 0 : index
    %c0_3 = arith.constant 0 : index
    %c0_4 = arith.constant 0 : index
    %1 = vector.load %arg2[%c0_2, %c0_3, %c0_4] : memref<1x1x128xf32, #tpu.memory_space<vmem>>, vector<1x1x128xf32>
    %c0_5 = arith.constant 0 : index
    %c0_6 = arith.constant 0 : index
    %c0_7 = arith.constant 0 : index
    %2 = vector.load %arg3[%c0_5, %c0_6, %c0_7] : memref<1x1x1xf32, #tpu.memory_space<vmem>>, vector<1x1x1xf32>
    %c0_8 = arith.constant 0 : index
    %c0_9 = arith.constant 0 : index
    %c0_10 = arith.constant 0 : index
    %3 = vector.load %arg4[%c0_8, %c0_9, %c0_10] : memref<2x1x1xi32, #tpu.memory_space<vmem>>, vector<2x1x1xi32>
    %4 = vector.broadcast %1 : vector<1x1x128xf32> to vector<2x8x128xf32>
    %5 = arith.mulf %0, %4 : vector<2x8x128xf32>
    %cst = arith.constant dense<0.000000e+00> : vector<2x8xf32>
    %6 = vector.multi_reduction <add>, %5, %cst [2] : vector<2x8x128xf32> to vector<2x8xf32>
    %7 = vector.shape_cast %6 : vector<2x8xf32> to vector<2x8x1xf32>
    %8 = vector.broadcast %2 : vector<1x1x1xf32> to vector<2x8x1xf32>
    %9 = arith.addf %7, %8 : vector<2x8x1xf32>
    %10 = tpu.iota {dimensions = array<i32: 1>} : vector<2x8x1xi32>
    %11 = vector.broadcast %3 : vector<2x1x1xi32> to vector<2x8x1xi32>
    %12 = arith.cmpi slt, %10, %11 : vector<2x8x1xi32>
    %cst_11 = arith.constant -3.000000e+38 : f32
    %13 = vector.broadcast %cst_11 : f32 to vector<2x8x1xf32>
    %14 = arith.select %12, %9, %13 : vector<2x8x1xi1>, vector<2x8x1xf32>
    %cst_12 = arith.constant dense<0xFF800000> : vector<2x1xf32>
    %15 = vector.multi_reduction <maximumf>, %14, %cst_12 [1] : vector<2x8x1xf32> to vector<2x1xf32>
    %16 = vector.shape_cast %15 : vector<2x1xf32> to vector<2x1x1xf32>
    %17 = vector.broadcast %16 : vector<2x1x1xf32> to vector<2x8x1xf32>
    %18 = arith.subf %14, %17 : vector<2x8x1xf32>
    %19 = math.exp %18 : vector<2x8x1xf32>
    %cst_13 = arith.constant 0.000000e+00 : f32
    %20 = vector.broadcast %cst_13 : f32 to vector<2x8x1xf32>
    %21 = arith.select %12, %19, %20 : vector<2x8x1xi1>, vector<2x8x1xf32>
    %cst_14 = arith.constant dense<0.000000e+00> : vector<2x1xf32>
    %22 = vector.multi_reduction <add>, %21, %cst_14 [1] : vector<2x8x1xf32> to vector<2x1xf32>
    %23 = vector.shape_cast %22 : vector<2x1xf32> to vector<2x1x1xf32>
    %cst_15 = arith.constant 1.000000e-30 : f32
    %24 = vector.broadcast %cst_15 : f32 to vector<2x1x1xf32>
    %25 = arith.maximumf %23, %24 : vector<2x1x1xf32>
    %26 = tpu.reciprocal %25 : vector<2x1x1xf32> -> vector<2x1x1xf32>
    %27 = vector.broadcast %26 : vector<2x1x1xf32> to vector<2x8x1xf32>
    %28 = arith.mulf %21, %27 : vector<2x8x1xf32>
    %29 = vector.broadcast %28 : vector<2x8x1xf32> to vector<2x8x128xf32>
    %30 = arith.mulf %29, %0 : vector<2x8x128xf32>
    %cst_16 = arith.constant dense<0.000000e+00> : vector<2x128xf32>
    %31 = vector.multi_reduction <add>, %30, %cst_16 [1] : vector<2x8x128xf32> to vector<2x128xf32>
    %c0_17 = arith.constant 0 : index
    %c0_18 = arith.constant 0 : index
    %32 = vector.load %arg5[%c0_17, %c0_18] : memref<2x128xf32, #tpu.memory_space<vmem>>, vector<2x128xf32>
    tpu.vector_store %arg5[%c0_17, %c0_18], %31 {strides = array<i32>} : memref<2x128xf32, #tpu.memory_space<vmem>>, vector<2x128xf32>,
    return
  }
  func.func @transform_0(%arg0: i32) -> (i32, i32, i32) {
    %c0_i32 = arith.constant 0 : i32
    %c0_i32_0 = arith.constant 0 : i32
    %c0_i32_1 = arith.constant 0 : i32
    return %arg0, %c0_i32, %c0_i32_0 : i32, i32, i32
  }
  func.func @transform_1(%arg0: i32) -> (i32, i32, i32) {
    %c0_i32 = arith.constant 0 : i32
    %c0_i32_0 = arith.constant 0 : i32
    %c0_i32_1 = arith.constant 0 : i32
    %c0_i32_2 = arith.constant 0 : i32
    return %c0_i32, %c0_i32_0, %c0_i32_1 : i32, i32, i32
  }
  func.func @transform_2(%arg0: i32) -> (i32, i32, i32) {
    %c0_i32 = arith.constant 0 : i32
    %c0_i32_0 = arith.constant 0 : i32
    %c0_i32_1 = arith.constant 0 : i32
    %c0_i32_2 = arith.constant 0 : i32
    return %c0_i32, %c0_i32_0, %c0_i32_1 : i32, i32, i32
  }
  func.func @transform_3(%arg0: i32) -> (i32, i32, i32) {
    %c0_i32 = arith.constant 0 : i32
    %c0_i32_0 = arith.constant 0 : i32
    %c0_i32_1 = arith.constant 0 : i32
    return %arg0, %c0_i32, %c0_i32_0 : i32, i32, i32
  }
  func.func @transform_4(%arg0: i32) -> (i32, i32) {
    %c0_i32 = arith.constant 0 : i32
    %c0_i32_0 = arith.constant 0 : i32
    return %arg0, %c0_i32 : i32, i32
  }
}

</mosaic_0001>

<llo_original>
// kernel: tpu_custom_call.1
$region0: #{tpu_custom_call.1}
  #allocation0 [shape = 'u32[]', space=smem, size = 0x4, offset = 0x4, fixed_abs, tag = 'smem constant byte address 0x4 - core index']
  #allocation1 [shape = 'u32[144,128]{1,0:T(1,128)}', space=vmem, size = 0x12000, scoped, tag = 'internal scratch']
  #allocation2 [shape = 'f32[1,1,1]{2,1,0:T(1,128)S(1)}', space=vmem, size = 0x200, scoped, tag = 'scoped memory for tpu_custom_call.1']
  %s0 = inlined_call_operand.hbm [shape: f32[2,8,128], index: 0, kind: input, shape index: {}]
  %s1 = inlined_call_operand.vmem [shape: f32[1,1,128], index: 1, kind: input, shape index: {}]
  %s2 = inlined_call_operand.<no memory space> [shape: f32[1,1,1], index: 2, kind: input, shape index: {}]
  %s3 = inlined_call_operand.vmem [shape: s32[2,1,1], index: 3, kind: input, shape index: {}]
  %s4 = inlined_call_operand.hbm [shape: f32[2,128], index: 4, kind: output, shape index: {}]
  %s5 = sld [smem:[#allocation0]]
  $region30: #{tpu_custom_call.1} parent=0
    _
  %s7 = ssub.s32 1, %s5
  %s8 = scalar_select 0, %s7, %s5
  %v9 = vstv %s2
  %10 = vst [vmem:[#allocation2] sm:$0x1] %v9
  $region1: #{tpu_custom_call.1} parent=0
    #allocation3 [shape = 'u8[8192]{0}', space=vmem, size = 0x2000, scoped, tag = 'input window, operand 0, single buffered']
    #allocation4 [shape = 's32[1]{0}', space=sflag, size = 0x4, scoped, tag = 'scoped memory for tpu_custom_call.1']
    #allocation5 [shape = 's32[1]{0}', space=sflag, size = 0x4, scoped, tag = 'scoped memory for tpu_custom_call.1']
    #allocation6 [shape = 'u8[1024]{0}', space=vmem, size = 0x400, scoped, tag = 'output window, operand 0, single buffered']
    %11 = vsyncpa [#allocation4], 0
    %12 = vsyncpa [#allocation5], 0
    // Predicated region
    $region2: #{tpu_custom_call.1} parent=1 // pred_check
      _
    $region3: #{tpu_custom_call.1} parent=1 // pred_check_branch
      %14 = sbr.rel (0) target = $region5
    $region4: #{tpu_custom_call.1} parent=1 // pred_region
      %s16 = ssub.s32 256, 256
      %17 = vsyncadd [#allocation4], %s16
      %s18 = sshll.u32 [#allocation3], 4
      %s19 = int_to_ptr.vmem [resolvable:$true] %s18
      %24 = dma.hbm_to_vmem [thread:$0]  %s0, 256, %s19, [#allocation4], 128, 128, 8
    $region5: #{tpu_custom_call.1} parent=1 // pred_fallthru
      _
    // Predicated region
    $region6: #{tpu_custom_call.1} parent=1 // pred_check
      _
    $region7: #{tpu_custom_call.1} parent=1 // pred_check_branch
      %26 = sbr.rel (0) target = $region9
    $region8: #{tpu_custom_call.1} parent=1 // pred_region
      _
    $region9: #{tpu_custom_call.1} parent=1 // pred_fallthru
      _
    // Predicated region
    $region10: #{tpu_custom_call.1} parent=1 // pred_check
      _
    $region11: #{tpu_custom_call.1} parent=1 // pred_check_branch
      %28 = sbr.rel (0) target = $region13
    $region12: #{tpu_custom_call.1} parent=1 // pred_region
      _
    $region13: #{tpu_custom_call.1} parent=1 // pred_fallthru
      _
    // Predicated region
    $region14: #{tpu_custom_call.1} parent=1 // pred_check
      _
    $region15: #{tpu_custom_call.1} parent=1 // pred_check_branch
      %30 = sbr.rel (0) target = $region17
    $region16: #{tpu_custom_call.1} parent=1 // pred_region
      _
    $region17: #{tpu_custom_call.1} parent=1 // pred_fallthru
      _
    // Predicated region
    $region18: #{tpu_custom_call.1} parent=1 // pred_check
      _
    $region19: #{tpu_custom_call.1} parent=1 // pred_check_branch
      %32 = sbr.rel (0) target = $region21
    $region20: #{tpu_custom_call.1} parent=1 // pred_region
      %33 = dma.done [#allocation4], 256
    $region21: #{tpu_custom_call.1} parent=1 // pred_fallthru
      _
    %v34 = vld [vmem:[#allocation3] sm:$0xff]
    %v35 = vld [vmem:[#allocation3 + $0x8] sm:$0xff]
    %v36 = vld [vmem:[%s1] sm:$0x1]
    %v37 = vld [vmem:[#allocation2] sm:$0x1]
    %v38 = vld [vmem:[%s3] sm:$0x1]
    %v39 = vld [vmem:[%s3 + $0x1] sm:$0x1]
    %v41 = vlaneseq
    %v42 = vshrl.u32 %v41, 7
    %v43 = vsub.s32 0, %v42
    %v44 = vrot.slane %v36, %v43
    %v46 = vmul.f32 %v34, %v44
    %v47 = vmul.f32 %v35, %v44
    %48 = vadd.xlane.f32.xlu0 %v46
    %v49 = vpop.xlane.xlu0 %48
    %50 = vadd.xlane.f32.xlu0 %v47
    %v51 = vpop.xlane.xlu0 %50
    %v53 = vlaneseq
    %v54 = vshrl.u32 %v53, 7
    %v55 = vsub.s32 0, %v54
    %v56 = vrot.slane %v37, %v55
    %v58 = vadd.f32 %v49, %v56
    %v59 = vadd.f32 %v51, %v56
    %v60 = vlaneseq
    %v61 = vshrl.u32 %v60, 7
    %v62 = vlaneseq
    %v63 = vshrl.u32 %v62, 7
    %v64 = vsub.s32 0, %v63
    %v65 = vrot.slane %v38, %v64
    %v66 = vlaneseq
    %v67 = vshrl.u32 %v66, 7
    %v68 = vsub.s32 0, %v67
    %v69 = vrot.slane %v39, %v68
    %vm70 = vcmp.lt.s32.totalorder %v61, %v65
    %vm71 = vcmp.lt.s32.totalorder %v61, %v69
    %v72 = vsel %vm70, %v58, -3e+38
    %v73 = vsel %vm71, %v59, -3e+38
    %vm74 = vcmask 7168
    %v75 = vsel %vm74, %v72, -inf
    %v76 = vrot.slane %v75, 4
    %v77 = vmax.f32 %v75, %v76
    %v78 = vrot.slane %v77, 2
    %v79 = vmax.f32 %v77, %v78
    %v80 = vrot.slane %v79, 1
    %v81 = vmax.f32 %v79, %v80
    %v82 = vsel %vm74, %v73, -inf
    %v83 = vrot.slane %v82, 4
    %v84 = vmax.f32 %v82, %v83
    %v85 = vrot.slane %v84, 2
    %v86 = vmax.f32 %v84, %v85
    %v87 = vrot.slane %v86, 1
    %v88 = vmax.f32 %v86, %v87
    %v89 = vsub.f32 %v72, %v81
    %v90 = vsub.f32 %v73, %v88
    %v91 = vmul.f32 %v89, 1.442695
    %v92 = vpow.pop %v91
    %v93 = vmul.f32 %v90, 1.442695
    %v94 = vpow.pop %v93
    %v95 = vsel %vm70, %v92, 0.0
    %v96 = vsel %vm71, %v94, 0.0
    %v97 = vsel %vm74, %v95, 0.0
    %v98 = vrot.slane %v97, 4
    %v99 = vadd.f32 %v97, %v98
    %v100 = vrot.slane %v99, 2
    %v101 = vadd.f32 %v99, %v100
    %v102 = vrot.slane %v101, 1
    %v103 = vadd.f32 %v101, %v102
    %v104 = vsel %vm74, %v96, 0.0
    %v105 = vrot.slane %v104, 4
    %v106 = vadd.f32 %v104, %v105
    %v107 = vrot.slane %v106, 2
    %v108 = vadd.f32 %v106, %v107
    %v109 = vrot.slane %v108, 1
    %v110 = vadd.f32 %v108, %v109
    %v111 = vmax.f32 %v103, 1e-30
    %v112 = vmax.f32 %v110, 1e-30
    %v113 = vrcp.pop %v111
    %v114 = vrcp.pop %v112
    %v115 = vmul.f32 %v95, %v113
    %v116 = vmul.f32 %v96, %v114
    %118 = vset.pattern.permute.xlu0 0
    %119 = vperm.xlu0 %118, %v115
    %v120 = vpop.permute.xlu0 %119
    %123 = vset.pattern.permute.xlu0 0
    %124 = vperm.xlu0 %123, %v116
    %v125 = vpop.permute.xlu0 %124
    %v127 = vmul.f32 %v120, %v34
    %v128 = vmul.f32 %v125, %v35
    %v129 = vrot.slane %v127, 4
    %v130 = vadd.f32 %v127, %v129
    %v131 = vrot.slane %v130, 2
    %v132 = vadd.f32 %v130, %v131
    %v133 = vrot.slane %v132, 1
    %v134 = vadd.f32 %v132, %v133
    %v135 = vrot.slane %v128, 4
    %v136 = vadd.f32 %v128, %v135
    %v137 = vrot.slane %v136, 2
    %v138 = vadd.f32 %v136, %v137
    %v139 = vrot.slane %v138, 1
    %v140 = vadd.f32 %v138, %v139
    %vm143 = vcmask 1041409
    %v144 = vsel %vm143, %v140, %v134
    %146 = vst [vmem:[#allocation6] sm:$0x3] %v144
    // Predicated region
    $region22: #{tpu_custom_call.1} parent=1 // pred_check
      _
    $region23: #{tpu_custom_call.1} parent=1 // pred_check_branch
      %148 = sbr.rel (0) target = $region25
    $region24: #{tpu_custom_call.1} parent=1 // pred_region
      %s150 = ssub.s32 32, 32
      %151 = vsyncadd [#allocation5], %s150
      %s153 = sshll.u32 [#allocation6], 4
      %s154 = int_to_ptr.vmem [resolvable:$true] %s153
      %156 = dma.vmem_to_hbm [thread:$0]  %s154, 32, %s4, [#allocation5]
    $region25: #{tpu_custom_call.1} parent=1 // pred_fallthru
      _
    // Predicated region
    $region26: #{tpu_custom_call.1} parent=1 // pred_check
      _
    $region27: #{tpu_custom_call.1} parent=1 // pred_check_branch
      %158 = sbr.rel (0) target = $region29
    $region28: #{tpu_custom_call.1} parent=1 // pred_region
      %159 = dma.done [#allocation5], 32
    $region29: #{tpu_custom_call.1} parent=1 // pred_fallthru
      _
    %160 = vsyncpa [#allocation4], 1
    %161 = vsyncpa [#allocation5], 1

</llo_original>
